<compile_context>
chip_gen: v6e
topology: v6e:2x2x1
jax: 0.10.0
libtpu: 0.0.40
codegen_flags: <defaults>
</compile_context>

<pallas_src>
import jax
import jax.numpy as jnp
from jax.experimental import pallas as pl
from jax.experimental.pallas import tpu as pltpu

HIDDEN = 128


def actor_kernel(x_ref, w1_ref, b1_ref, w2_ref, b2_ref, o_ref):
    # ----- Layer 1: Linear(in_dim, 128) + ReLU (MXU, f32 accumulate) -----
    h = jnp.dot(x_ref[...], w1_ref[...], preferred_element_type=jnp.float32)
    h = jnp.maximum(h + b1_ref[...], 0.0)          # f32 bias add + ReLU (VPU)

    # ----- Layer 2: Linear(128, out_dim) + Sigmoid, at narrow out_dim width -----
    h = h.astype(w2_ref.dtype)                     # no-op in f32 mode; bf16 if pre-cast
    z = jnp.dot(h, w2_ref[...], preferred_element_type=jnp.float32) + b2_ref[...]
    o_ref[...] = jax.nn.sigmoid(z).astype(o_ref.dtype)


def _round_up(x, m):
    return ((x + m - 1) // m) * m


def actor_forward(x, w1, b1, w2, b2, *, block_b=8192, use_bf16=False):
    """x: (B, in_dim) f32 -> (B, out_dim) f32."""
    B, in_dim = x.shape
    hidden = w1.shape[1]
    out_dim = w2.shape[1]

    if use_bf16:
        # Pre-cast MXU operands once in the wrapper (halves x / weight DMA bytes;
        # avoids a per-grid-step cast of the resident weights inside the kernel).
        x = x.astype(jnp.bfloat16)
        w1 = w1.astype(jnp.bfloat16)
        w2 = w2.astype(jnp.bfloat16)

    # --- batch tile: multiple of 8 sublanes; even grid (>=2 steps) when the
    #     batch is large enough so both v7x TensorCores get equal work. ---
    if B > block_b:
        n_steps = 2 * pl.cdiv(B, 2 * block_b)          # even step count
    elif B >= 2048:
        n_steps = 2                                    # still split for v7x megacore
    else:
        n_steps = 1
    tb = _round_up(pl.cdiv(B, n_steps), 8)
    grid = (pl.cdiv(B, tb),)                           # ragged last block is masked

    out = pl.pallas_call(
        actor_kernel,
        out_shape=jax.ShapeDtypeStruct((B, out_dim), jnp.float32),
        grid=grid,
        in_specs=[
            # x tile marches down the batch; weights/biases stay VMEM-resident.
            pl.BlockSpec((tb, in_dim), lambda i: (i, 0)),
            pl.BlockSpec((in_dim, hidden), lambda i: (0, 0)),
            pl.BlockSpec((1, hidden), lambda i: (0, 0)),
            pl.BlockSpec((hidden, out_dim), lambda i: (0, 0)),
            pl.BlockSpec((1, out_dim), lambda i: (0, 0)),
        ],
        out_specs=pl.BlockSpec((tb, out_dim), lambda i: (i, 0)),
        compiler_params=pltpu.CompilerParams(
            dimension_semantics=("parallel",),          # megacore sharding on v7x
        ),
    )(x, w1, b1, w2, b2)

    return out


def init_actor_params(key, input_dim, output_dim, hidden=HIDDEN):
    """Deterministic init mimicking torch.nn.Linear default U(-1/sqrt(fan_in), +)."""
    k1, k2, k3, k4 = jax.random.split(key, 4)
    lim1 = 1.0 / jnp.sqrt(jnp.float32(input_dim))
    lim2 = 1.0 / jnp.sqrt(jnp.float32(hidden))
    w1 = jax.random.uniform(k1, (input_dim, hidden), jnp.float32, -lim1, lim1)
    b1 = jax.random.uniform(k2, (1, hidden), jnp.float32, -lim1, lim1)
    w2 = jax.random.uniform(k3, (hidden, output_dim), jnp.float32, -lim2, lim2)
    b2 = jax.random.uniform(k4, (1, output_dim), jnp.float32, -lim2, lim2)
    return w1, b1, w2, b2


def _reference(x, w1, b1, w2, b2):
    return jax.nn.sigmoid(jnp.maximum(x @ w1 + b1, 0.0) @ w2 + b2)


if __name__ == "__main__":
    key = jax.random.PRNGKey(0)
    input_dim, output_dim = 16, 8
    k_state, k_params, k_big = jax.random.split(key, 3)
    w1, b1, w2, b2 = init_actor_params(k_params, input_dim, output_dim)

    # --- small batch (typical per-agent call), single grid step, f32 path ---
    B_small = 8
    state = jax.random.normal(k_state, (B_small, input_dim), jnp.float32)
    out = jax.block_until_ready(actor_forward(state, w1, b1, w2, b2))
    assert out.shape == (B_small, output_dim)
    assert bool(jnp.all((out > 0.0) & (out < 1.0)))
    ref = _reference(state, w1, b1, w2, b2)
    assert bool(jnp.allclose(out, ref, atol=1e-5, rtol=1e-5))

    # --- stacked batch (not a multiple of the tile) -> even grid + ragged block ---
    B_big = 2050
    state_big = jax.random.normal(k_big, (B_big, input_dim), jnp.float32)
    out_big = jax.block_until_ready(actor_forward(state_big, w1, b1, w2, b2))
    assert out_big.shape == (B_big, output_dim)
    ref_big = _reference(state_big, w1, b1, w2, b2)
    assert bool(jnp.allclose(out_big, ref_big, atol=1e-5, rtol=1e-5))

    # --- bf16-operand / f32-accumulate path, looser tolerance ---
    out_bf16 = jax.block_until_ready(
        actor_forward(state_big, w1, b1, w2, b2, use_bf16=True))
    assert bool(jnp.allclose(out_bf16, ref_big, atol=2e-2, rtol=2e-2))

    print("KERNEL_OK")
</pallas_src>

<mosaic_0001>
module attributes {stable_mosaic.version = 11 : i64} {
  func.func @actor_kernel(%arg0: i32, %arg1: memref<8x16xf32, #tpu.memory_space<vmem>>, %arg2: memref<16x128xf32, #tpu.memory_space<vmem>>, %arg3: memref<1x128xf32, #tpu.memory_space<vmem>>, %arg4: memref<128x8xf32, #tpu.memory_space<vmem>>, %arg5: memref<1x8xf32, #tpu.memory_space<vmem>>, %arg6: memref<8x8xf32, #tpu.memory_space<vmem>>) attributes {dimension_semantics = [#tpu.dimension_semantics<parallel>], iteration_bounds = array<i64: 1>, scalar_prefetch = 0 : i64, scratch_operands = 0 : i64, tpu.core_type = #tpu.core_type<tc>, window_params = [{transform_indices = @transform_0, window_bounds = array<i64: 8, 16>}, {pipeline_mode = #tpu.pipeline_mode<synchronous>, transform_indices = @transform_1, window_bounds = array<i64: 16, 128>}, {pipeline_mode = #tpu.pipeline_mode<synchronous>, transform_indices = @transform_2, window_bounds = array<i64: 1, 128>}, {pipeline_mode = #tpu.pipeline_mode<synchronous>, transform_indices = @transform_3, window_bounds = array<i64: 128, 8>}, {pipeline_mode = #tpu.pipeline_mode<synchronous>, transform_indices = @transform_4, window_bounds = array<i64: 1, 8>}, {transform_indices = @transform_5, window_bounds = array<i64: 8, 8>}]} {
    %c0 = arith.constant 0 : index
    %c0_0 = arith.constant 0 : index
    %0 = vector.load %arg1[%c0, %c0_0] : memref<8x16xf32, #tpu.memory_space<vmem>>, vector<8x16xf32>
    %c0_1 = arith.constant 0 : index
    %c0_2 = arith.constant 0 : index
    %1 = vector.load %arg2[%c0_1, %c0_2] : memref<16x128xf32, #tpu.memory_space<vmem>>, vector<16x128xf32>
    %cst = arith.constant dense<0.000000e+00> : vector<8x128xf32>
    %2 = tpu.matmul %0, %1, %cst {dimension_numbers = #tpu.dot_dimension_numbers<[1], [0], [0], [1], [0, 0, 1, 1], [], []>} : vector<8x16xf32>, vector<16x128xf32>, vector<8x128xf32> -> vector<8x128xf32>
    %c0_3 = arith.constant 0 : index
    %c0_4 = arith.constant 0 : index
    %3 = vector.load %arg3[%c0_3, %c0_4] : memref<1x128xf32, #tpu.memory_space<vmem>>, vector<1x128xf32>
    %4 = vector.broadcast %3 : vector<1x128xf32> to vector<8x128xf32>
    %5 = arith.addf %2, %4 : vector<8x128xf32>
    %cst_5 = arith.constant 0.000000e+00 : f32
    %6 = vector.broadcast %cst_5 : f32 to vector<8x128xf32>
    %7 = arith.maximumf %5, %6 : vector<8x128xf32>
    %c0_6 = arith.constant 0 : index
    %c0_7 = arith.constant 0 : index
    %8 = vector.load %arg4[%c0_6, %c0_7] : memref<128x8xf32, #tpu.memory_space<vmem>>, vector<128x8xf32>
    %cst_8 = arith.constant dense<0.000000e+00> : vector<8x8xf32>
    %9 = tpu.matmul %7, %8, %cst_8 {dimension_numbers = #tpu.dot_dimension_numbers<[1], [0], [0], [1], [0, 0, 1, 1], [], []>} : vector<8x128xf32>, vector<128x8xf32>, vector<8x8xf32> -> vector<8x8xf32>
    %c0_9 = arith.constant 0 : index
    %c0_10 = arith.constant 0 : index
    %10 = vector.load %arg5[%c0_9, %c0_10] : memref<1x8xf32, #tpu.memory_space<vmem>>, vector<1x8xf32>
    %11 = vector.broadcast %10 : vector<1x8xf32> to vector<8x8xf32>
    %12 = arith.addf %9, %11 : vector<8x8xf32>
    %13 = arith.negf %12 : vector<8x8xf32>
    %14 = math.exp %13 : vector<8x8xf32>
    %cst_11 = arith.constant 1.000000e+00 : f32
    %15 = vector.broadcast %cst_11 : f32 to vector<8x8xf32>
    %16 = arith.addf %15, %14 : vector<8x8xf32>
    %17 = arith.divf %15, %16 : vector<8x8xf32>
    %c0_12 = arith.constant 0 : index
    %c0_13 = arith.constant 0 : index
    %18 = vector.load %arg6[%c0_12, %c0_13] : memref<8x8xf32, #tpu.memory_space<vmem>>, vector<8x8xf32>
    tpu.vector_store %arg6[%c0_12, %c0_13], %17 {strides = array<i32>} : memref<8x8xf32, #tpu.memory_space<vmem>>, vector<8x8xf32>,
    return
  }
  func.func @transform_0(%arg0: i32) -> (i32, i32) {
    %c0_i32 = arith.constant 0 : i32
    %c0_i32_0 = arith.constant 0 : i32
    return %arg0, %c0_i32 : i32, i32
  }
  func.func @transform_1(%arg0: i32) -> (i32, i32) {
    %c0_i32 = arith.constant 0 : i32
    %c0_i32_0 = arith.constant 0 : i32
    %c0_i32_1 = arith.constant 0 : i32
    return %c0_i32, %c0_i32_0 : i32, i32
  }
  func.func @transform_2(%arg0: i32) -> (i32, i32) {
    %c0_i32 = arith.constant 0 : i32
    %c0_i32_0 = arith.constant 0 : i32
    %c0_i32_1 = arith.constant 0 : i32
    return %c0_i32, %c0_i32_0 : i32, i32
  }
  func.func @transform_3(%arg0: i32) -> (i32, i32) {
    %c0_i32 = arith.constant 0 : i32
    %c0_i32_0 = arith.constant 0 : i32
    %c0_i32_1 = arith.constant 0 : i32
    return %c0_i32, %c0_i32_0 : i32, i32
  }
  func.func @transform_4(%arg0: i32) -> (i32, i32) {
    %c0_i32 = arith.constant 0 : i32
    %c0_i32_0 = arith.constant 0 : i32
    %c0_i32_1 = arith.constant 0 : i32
    return %c0_i32, %c0_i32_0 : i32, i32
  }
  func.func @transform_5(%arg0: i32) -> (i32, i32) {
    %c0_i32 = arith.constant 0 : i32
    %c0_i32_0 = arith.constant 0 : i32
    return %arg0, %c0_i32 : i32, i32
  }
}

</mosaic_0001>

<llo_original>
// kernel: tpu_custom_call.1
$region0: #{tpu_custom_call.1}
  #allocation0 [shape = 'u32[]', space=smem, size = 0x4, offset = 0x4, fixed_abs, tag = 'smem constant byte address 0x4 - core index']
  #allocation1 [shape = 'u32[144,128]{1,0:T(1,128)}', space=vmem, size = 0x12000, scoped, tag = 'internal scratch']
  %s0 = inlined_call_operand.vmem [shape: f32[8,16], index: 0, kind: input, shape index: {}]
  %s1 = inlined_call_operand.vmem [shape: f32[16,128], index: 1, kind: input, shape index: {}]
  %s2 = inlined_call_operand.vmem [shape: f32[1,128], index: 2, kind: input, shape index: {}]
  %s3 = inlined_call_operand.vmem [shape: f32[128,8], index: 3, kind: input, shape index: {}]
  %s4 = inlined_call_operand.vmem [shape: f32[1,8], index: 4, kind: input, shape index: {}]
  %s5 = inlined_call_operand.hbm [shape: f32[8,8], index: 5, kind: output, shape index: {}]
  %s6 = sld [smem:[#allocation0]]
  $region30: #{tpu_custom_call.1} parent=0
    _
  %s8 = ssub.s32 1, %s6
  %s9 = scalar_select 0, %s8, %s6
  $region1: #{tpu_custom_call.1} parent=0
    #allocation2 [shape = 'u8[4096]{0}', space=vmem, size = 0x1000, scoped, tag = 'output window, operand 0, single buffered']
    #allocation3 [shape = 's32[1]{0}', space=sflag, size = 0x4, scoped, tag = 'scoped memory for tpu_custom_call.1']
    %10 = vsyncpa [#allocation3], 0
    // Predicated region
    $region2: #{tpu_custom_call.1} parent=1 // pred_check
      _
    $region3: #{tpu_custom_call.1} parent=1 // pred_check_branch
      %12 = sbr.rel (0) target = $region5
    $region4: #{tpu_custom_call.1} parent=1 // pred_region
      _
    $region5: #{tpu_custom_call.1} parent=1 // pred_fallthru
      _
    // Predicated region
    $region6: #{tpu_custom_call.1} parent=1 // pred_check
      _
    $region7: #{tpu_custom_call.1} parent=1 // pred_check_branch
      %14 = sbr.rel (0) target = $region9
    $region8: #{tpu_custom_call.1} parent=1 // pred_region
      _
    $region9: #{tpu_custom_call.1} parent=1 // pred_fallthru
      _
    // Predicated region
    $region10: #{tpu_custom_call.1} parent=1 // pred_check
      _
    $region11: #{tpu_custom_call.1} parent=1 // pred_check_branch
      %16 = sbr.rel (0) target = $region13
    $region12: #{tpu_custom_call.1} parent=1 // pred_region
      _
    $region13: #{tpu_custom_call.1} parent=1 // pred_fallthru
      _
    // Predicated region
    $region14: #{tpu_custom_call.1} parent=1 // pred_check
      _
    $region15: #{tpu_custom_call.1} parent=1 // pred_check_branch
      %18 = sbr.rel (0) target = $region17
    $region16: #{tpu_custom_call.1} parent=1 // pred_region
      _
    $region17: #{tpu_custom_call.1} parent=1 // pred_fallthru
      _
    // Predicated region
    $region18: #{tpu_custom_call.1} parent=1 // pred_check
      _
    $region19: #{tpu_custom_call.1} parent=1 // pred_check_branch
      %20 = sbr.rel (0) target = $region21
    $region20: #{tpu_custom_call.1} parent=1 // pred_region
      _
    $region21: #{tpu_custom_call.1} parent=1 // pred_fallthru
      _
    %v21 = vld [vmem:[%s0] sm:$0xff]
    %v22 = vld [vmem:[%s1] sm:$0xff]
    %v23 = vld [vmem:[%s1 + $0x8] sm:$0xff]
    %v24 = vld [vmem:[%s2] sm:$0x1]
    %v26 = vlaneseq
    %v27 = vshrl.u32 %v26, 7
    %v28 = vsub.s32 0, %v27
    %v29 = vrot.slane %v24, %v28
    %vm31 = vcmask 130048
    %v33 = vsel %vm31, %v21, 0
    %35 = vmatprep.subr.mxu0 0.0
    %36 = vmatpush1.msra.mxu0 0.0
    %37 = vmatprep.subr.mxu0 0.0
    %38 = vmatpush1.msra.mxu0 0.0
    %39 = vmatprep.subr.mxu0 0.0
    %40 = vmatpush1.msra.mxu0 0.0
    %41 = vmatprep.subr.mxu0 0.0
    %42 = vmatpush1.msra.mxu0 0.0
    %43 = vmatprep.subr.mxu0 0.0
    %44 = vmatpush1.msra.mxu0 0.0
    %45 = vmatprep.subr.mxu0 0.0
    %46 = vmatpush1.msra.mxu0 0.0
    %47 = vmatprep.subr.mxu0 0.0
    %48 = vmatpush1.msra.mxu0 0.0
    %49 = vmatprep.subr.mxu0 0.0
    %50 = vmatpush1.msra.mxu0 0.0
    %51 = vmatprep.subr.mxu0 0.0
    %52 = vmatpush1.msra.mxu0 0.0
    %53 = vmatprep.subr.mxu0 0.0
    %54 = vmatpush1.msra.mxu0 0.0
    %55 = vmatprep.subr.mxu0 0.0
    %56 = vmatpush1.msra.mxu0 0.0
    %57 = vmatprep.subr.mxu0 0.0
    %58 = vmatpush1.msra.mxu0 0.0
    %59 = vmatprep.subr.mxu0 0.0
    %60 = vmatpush1.msra.mxu0 0.0
    %61 = vmatprep.subr.mxu0 0.0
    %62 = vmatpush1.msra.mxu0 0.0
    %63 = vmatprep.subr.mxu0 0.0
    %64 = vmatpush1.msra.mxu0 %v23
    %65 = vmatprep.subr.mxu0 0.0
    %66 = vmatpush1.msra.mxu0 %v22
    %67 = vmatprep.subr.mxu0 0.0
    %68 = vmatpush2.msra.mxu0 0.0
    %69 = vmatprep.subr.mxu0 0.0
    %70 = vmatpush2.msra.mxu0 0.0
    %71 = vmatprep.subr.mxu0 0.0
    %72 = vmatpush2.msra.mxu0 0.0
    %73 = vmatprep.subr.mxu0 0.0
    %74 = vmatpush2.msra.mxu0 0.0
    %75 = vmatprep.subr.mxu0 0.0
    %76 = vmatpush2.msra.mxu0 0.0
    %77 = vmatprep.subr.mxu0 0.0
    %78 = vmatpush2.msra.mxu0 0.0
    %79 = vmatprep.subr.mxu0 0.0
    %80 = vmatpush2.msra.mxu0 0.0
    %81 = vmatprep.subr.mxu0 0.0
    %82 = vmatpush2.msra.mxu0 0.0
    %83 = vmatprep.subr.mxu0 0.0
    %84 = vmatpush2.msra.mxu0 0.0
    %85 = vmatprep.subr.mxu0 0.0
    %86 = vmatpush2.msra.mxu0 0.0
    %87 = vmatprep.subr.mxu0 0.0
    %88 = vmatpush2.msra.mxu0 0.0
    %89 = vmatprep.subr.mxu0 0.0
    %90 = vmatpush2.msra.mxu0 0.0
    %91 = vmatprep.subr.mxu0 0.0
    %92 = vmatpush2.msra.mxu0 0.0
    %93 = vmatprep.subr.mxu0 0.0
    %94 = vmatpush2.msra.mxu0 0.0
    %95 = vmatprep.subr.mxu0 0.0
    %96 = vmatpush2.msra.mxu0 0.0
    %97 = vmatprep.subr.mxu0 0.0
    %98 = vmatpush2.msra.mxu0 0.0
    %99 = vmatprep.mubr.f32.mxu0 0.0
    %100 = vmatmul.mubr.f32.gmra.mxu0 %v33
    %v101 = vpop.f32.mrf.mxu0
    %v102 = vadd.f32 %v29, %v101
    %v103 = vpop.f32.mrf.mxu0
    %104 = vdwg.mxu0
    %v105 = vmax.f32 %v102, 0.0
    %v106 = vld [vmem:[%s3] sm:$0xff]
    %v107 = vld [vmem:[%s3 + $0x8] sm:$0xff]
    %v108 = vld [vmem:[%s3 + $0x10] sm:$0xff]
    %v109 = vld [vmem:[%s3 + $0x18] sm:$0xff]
    %v110 = vld [vmem:[%s3 + $0x20] sm:$0xff]
    %v111 = vld [vmem:[%s3 + $0x28] sm:$0xff]
    %v112 = vld [vmem:[%s3 + $0x30] sm:$0xff]
    %v113 = vld [vmem:[%s3 + $0x38] sm:$0xff]
    %v114 = vld [vmem:[%s3 + $0x40] sm:$0xff]
    %v115 = vld [vmem:[%s3 + $0x48] sm:$0xff]
    %v116 = vld [vmem:[%s3 + $0x50] sm:$0xff]
    %v117 = vld [vmem:[%s3 + $0x58] sm:$0xff]
    %v118 = vld [vmem:[%s3 + $0x60] sm:$0xff]
    %v119 = vld [vmem:[%s3 + $0x68] sm:$0xff]
    %v120 = vld [vmem:[%s3 + $0x70] sm:$0xff]
    %v121 = vld [vmem:[%s3 + $0x78] sm:$0xff]
    %v122 = vld [vmem:[%s4] sm:$0x1]
    %v124 = vlaneseq
    %v125 = vshrl.u32 %v124, 7
    %v126 = vsub.s32 0, %v125
    %v127 = vrot.slane %v122, %v126
    %129 = vmatprep.subr.mxu0 0.0
    %130 = vmatpush1.msra.mxu0 %v121
    %131 = vmatprep.subr.mxu0 0.0
    %132 = vmatpush1.msra.mxu0 %v120
    %133 = vmatprep.subr.mxu0 0.0
    %134 = vmatpush1.msra.mxu0 %v119
    %135 = vmatprep.subr.mxu0 0.0
    %136 = vmatpush1.msra.mxu0 %v118
    %137 = vmatprep.subr.mxu0 0.0
    %138 = vmatpush1.msra.mxu0 %v117
    %139 = vmatprep.subr.mxu0 0.0
    %140 = vmatpush1.msra.mxu0 %v116
    %141 = vmatprep.subr.mxu0 0.0
    %142 = vmatpush1.msra.mxu0 %v115
    %143 = vmatprep.subr.mxu0 0.0
    %144 = vmatpush1.msra.mxu0 %v114
    %145 = vmatprep.subr.mxu0 0.0
    %146 = vmatpush1.msra.mxu0 %v113
    %147 = vmatprep.subr.mxu0 0.0
    %148 = vmatpush1.msra.mxu0 %v112
    %149 = vmatprep.subr.mxu0 0.0
    %150 = vmatpush1.msra.mxu0 %v111
    %151 = vmatprep.subr.mxu0 0.0
    %152 = vmatpush1.msra.mxu0 %v110
    %153 = vmatprep.subr.mxu0 0.0
    %154 = vmatpush1.msra.mxu0 %v109
    %155 = vmatprep.subr.mxu0 0.0
    %156 = vmatpush1.msra.mxu0 %v108
    %157 = vmatprep.subr.mxu0 0.0
    %158 = vmatpush1.msra.mxu0 %v107
    %159 = vmatprep.subr.mxu0 0.0
    %160 = vmatpush1.msra.mxu0 %v106
    %161 = vmatprep.subr.mxu0 0.0
    %162 = vmatpush2.msra.mxu0 0.0
    %163 = vmatprep.subr.mxu0 0.0
    %164 = vmatpush2.msra.mxu0 0.0
    %165 = vmatprep.subr.mxu0 0.0
    %166 = vmatpush2.msra.mxu0 0.0
    %167 = vmatprep.subr.mxu0 0.0
    %168 = vmatpush2.msra.mxu0 0.0
    %169 = vmatprep.subr.mxu0 0.0
    %170 = vmatpush2.msra.mxu0 0.0
    %171 = vmatprep.subr.mxu0 0.0
    %172 = vmatpush2.msra.mxu0 0.0
    %173 = vmatprep.subr.mxu0 0.0
    %174 = vmatpush2.msra.mxu0 0.0
    %175 = vmatprep.subr.mxu0 0.0
    %176 = vmatpush2.msra.mxu0 0.0
    %177 = vmatprep.subr.mxu0 0.0
    %178 = vmatpush2.msra.mxu0 0.0
    %179 = vmatprep.subr.mxu0 0.0
    %180 = vmatpush2.msra.mxu0 0.0
    %181 = vmatprep.subr.mxu0 0.0
    %182 = vmatpush2.msra.mxu0 0.0
    %183 = vmatprep.subr.mxu0 0.0
    %184 = vmatpush2.msra.mxu0 0.0
    %185 = vmatprep.subr.mxu0 0.0
    %186 = vmatpush2.msra.mxu0 0.0
    %187 = vmatprep.subr.mxu0 0.0
    %188 = vmatpush2.msra.mxu0 0.0
    %189 = vmatprep.subr.mxu0 0.0
    %190 = vmatpush2.msra.mxu0 0.0
    %191 = vmatprep.subr.mxu0 0.0
    %192 = vmatpush2.msra.mxu0 0.0
    %193 = vmatprep.mubr.f32.mxu0 0.0
    %194 = vmatmul.mubr.f32.gmra.mxu0 %v105
    %v195 = vpop.f32.mrf.mxu0
    %v196 = vadd.f32 %v127, %v195
    %v197 = vpop.f32.mrf.mxu0
    %198 = vdwg.mxu0
    %v199 = vxor.u32 %v196, 2147483648
    %v200 = vmul.f32 %v199, 1.442695
    %v201 = vpow.pop %v200
    %v202 = vadd.f32 %v201, 1.0
    %v203 = vrcp.pop %v202
    %v204 = vmul.f32 1.0, %v203
    %vm205 = vcmask 64512
    %206 = vst.msk [vmem:[#allocation2] sm:$0xff] %vm205, %v204
    // Predicated region
    $region22: #{tpu_custom_call.1} parent=1 // pred_check
      _
    $region23: #{tpu_custom_call.1} parent=1 // pred_check_branch
      %208 = sbr.rel (0) target = $region25
    $region24: #{tpu_custom_call.1} parent=1 // pred_region
      %s210 = ssub.s32 128, 128
      %211 = vsyncadd [#allocation3], %s210
      %s213 = sshll.u32 [#allocation2], 4
      %s214 = int_to_ptr.vmem [resolvable:$true] %s213
      %216 = dma.vmem_to_hbm [thread:$0]  %s214, 128, %s5, [#allocation3]
    $region25: #{tpu_custom_call.1} parent=1 // pred_fallthru
      _
    // Predicated region
    $region26: #{tpu_custom_call.1} parent=1 // pred_check
      _
    $region27: #{tpu_custom_call.1} parent=1 // pred_check_branch
      %218 = sbr.rel (0) target = $region29
    $region28: #{tpu_custom_call.1} parent=1 // pred_region
      %219 = dma.done [#allocation3], 128
    $region29: #{tpu_custom_call.1} parent=1 // pred_fallthru
      _
    %220 = vsyncpa [#allocation3], 1

</llo_original>
